<compile_context>
chip_gen: v6e
topology: v6e:2x2x1
jax: 0.10.0
libtpu: 0.0.40
codegen_flags: <defaults>
</compile_context>

<pallas_src>
import functools

import jax
import jax.numpy as jnp
from jax.experimental import pallas as pl
from jax.experimental.pallas import tpu as pltpu

_PI = 3.141592653589793


def _acos(x):
    """float32 arccos for x in [-1, 1] (A&S 4.4.46 minimax, |err| <= 2e-8)."""
    ax = jnp.abs(x)
    p = jnp.float32(-0.0012624911)
    p = p * ax + jnp.float32(0.0066700901)
    p = p * ax + jnp.float32(-0.0170881256)
    p = p * ax + jnp.float32(0.0308918810)
    p = p * ax + jnp.float32(-0.0501743046)
    p = p * ax + jnp.float32(0.0889789874)
    p = p * ax + jnp.float32(-0.2145988016)
    p = p * ax + jnp.float32(1.5707963050)
    r = p * jnp.sqrt(jnp.maximum(1.0 - ax, 0.0))
    return jnp.where(x < 0, jnp.float32(_PI) - r, r)


def _sam_kernel(o_ref, t_ref, part_ref, *, rows, tp, need_mask):
    """One (C, tp, cols) block -> scalar partial angle-sum, stored lane-dense."""
    c = o_ref.shape[0]

    # Per-channel accumulation: live data bounded to ~5 (tp, cols) f32 slabs
    # instead of ~5x C*tp*cols of upcast copies + products.
    o0 = o_ref[0].astype(jnp.float32)
    t0 = t_ref[0].astype(jnp.float32)
    carry = (o0 * t0, o0 * o0, t0 * t0)

    def chan(k, carry):
        dot, on2, tn2 = carry
        ok = o_ref[k].astype(jnp.float32)
        tk = t_ref[k].astype(jnp.float32)
        return (dot + ok * tk, on2 + ok * ok, tn2 + tk * tk)

    if c <= 32:                       # static unroll: LLO scheduler visibility
        for k in range(1, c):
            carry = chan(k, carry)
    else:                             # hyperspectral-style C: rolled loop
        carry = jax.lax.fori_loop(1, c, chan, carry)
    dot, on2, tn2 = carry

    cosv = dot * jax.lax.rsqrt(on2 * tn2)           # 1 EUP push + 1 mul
    ang = _acos(jnp.clip(cosv, -1.0, 1.0))          # (tp, cols) f32

    if need_mask:  # static: only emitted when the grid over-covers the rows
        ri = pl.program_id(1)
        is_edge = ri == pl.num_programs(1) - 1

        @pl.when(is_edge)
        def _():
            # Mask (select, not multiply) BEFORE the reduce: OOB rows may hold
            # garbage/NaN from the over-covering block.
            row = ri * tp + jax.lax.broadcasted_iota(jnp.int32, ang.shape, 0)
            val = jnp.sum(jnp.where(row < rows, ang, 0.0))
            part_ref[...] = jnp.full((8, 128), val, jnp.float32)

        @pl.when(ri != pl.num_programs(1) - 1)
        def _():
            part_ref[...] = jnp.full((8, 128), jnp.sum(ang), jnp.float32)
    else:
        part_ref[...] = jnp.full((8, 128), jnp.sum(ang), jnp.float32)


def loss_sam(outputs, label, *, block_bytes=4 << 20):
    """Mean spectral angle between `outputs` and `label` (both NCHW).

    `block_bytes` is the per-input-block budget in f32-equivalent bytes
    (bf16 inputs get the same element count, half the HBM bytes).
    """
    assert outputs.shape == label.shape and outputs.ndim == 4
    n, c, h, w = outputs.shape
    itemsize = jnp.dtype(outputs.dtype).itemsize
    sub_q = 8 if itemsize >= 4 else (16 if itemsize == 2 else 32)

    p = h * w
    if p % 128 == 0:
        # Free reshape of the contiguous per-channel spatial plane -> fully
        # lane-dense (rows, 128) slabs; per-channel DMA chunks are contiguous.
        rows, cols = p // 128, 128
        o_in = outputs.reshape(n, c, rows, cols)
        l_in = label.reshape(n, c, rows, cols)
    else:
        # Fallback: full-width spatial blocks (lane-sparse only if W < 128).
        rows, cols = h, w
        o_in, l_in = outputs, label

    # Row-tile size targeting ~block_bytes (f32-equivalent) per input block.
    max_tp = max(1, block_bytes // (c * cols * 4))
    if max_tp >= rows or rows <= sub_q:
        tp = rows                                    # full-dim exception
    else:
        tp = max(sub_q, (max_tp // sub_q) * sub_q)   # multiple of sublane quantum

    gr = pl.cdiv(rows, tp)
    need_mask = gr * tp > rows

    in_spec = pl.BlockSpec((None, c, tp, cols), lambda ni, ri: (ni, 0, ri, 0))

    parts = pl.pallas_call(
        functools.partial(_sam_kernel, rows=rows, tp=tp, need_mask=need_mask),
        out_shape=jax.ShapeDtypeStruct((n, gr, 8, 128), jnp.float32),
        grid_spec=pltpu.PrefetchScalarGridSpec(
            num_scalar_prefetch=0,
            grid=(n, gr),
            in_specs=[in_spec, in_spec],
            out_specs=pl.BlockSpec((None, None, 8, 128),
                                   lambda ni, ri: (ni, ri, 0, 0)),
        ),
        compiler_params=pltpu.CompilerParams(
            # Every grid step is independent -> both axes parallel (megacore).
            dimension_semantics=("parallel", "parallel"),
            vmem_limit_bytes=32 * 1024 * 1024,
        ),
    )(o_in, l_in)

    return jnp.sum(parts[:, :, 0, 0]) / (n * h * w)


def loss_sam_ref(outputs, label):
    """Pure-JAX reference matching torchmetrics SpectralAngleMapper + mean."""
    o = outputs.astype(jnp.float32)
    t = label.astype(jnp.float32)
    dot = jnp.sum(o * t, axis=1)
    denom = jnp.linalg.norm(o, axis=1) * jnp.linalg.norm(t, axis=1)
    ang = jnp.arccos(jnp.clip(dot / denom, -1.0, 1.0))
    return jnp.mean(ang)


if __name__ == "__main__":
    key = jax.random.PRNGKey(0)
    k1, k2, k3, k4 = jax.random.split(key, 4)

    # 1) Small NCHW, H*W % 128 == 0 -> lane-dense flattened path, single block.
    outputs = jax.random.uniform(k1, (2, 4, 16, 16), dtype=jnp.float32) + 0.05
    label = jax.random.uniform(k2, (2, 4, 16, 16), dtype=jnp.float32) + 0.05
    got = loss_sam(outputs, label)
    jax.block_until_ready(got)
    ref = loss_sam_ref(outputs, label)
    assert jnp.allclose(got, ref, rtol=1e-4, atol=1e-5), (got, ref)

    # 2) Multi-tile flattened path with row-tail mask (36 rows, 8-row tiles
    #    forced by a tiny block budget) + both-axes-parallel grid.
    o2 = jax.random.uniform(k3, (2, 4, 36, 128), dtype=jnp.float32) + 0.05
    l2 = jax.random.uniform(k4, (2, 4, 36, 128), dtype=jnp.float32) + 0.05
    got2 = loss_sam(o2, l2, block_bytes=16 * 1024)
    jax.block_until_ready(got2)
    ref2 = loss_sam_ref(o2, l2)
    assert jnp.allclose(got2, ref2, rtol=1e-4, atol=1e-5), (got2, ref2)

    # 3) Fallback path (H*W not a multiple of 128) with multi-tile + tail mask.
    k5, k6 = jax.random.split(k3)
    o3 = jax.random.uniform(k5, (2, 3, 20, 20), dtype=jnp.float32) + 0.05
    l3 = jax.random.uniform(k6, (2, 3, 20, 20), dtype=jnp.float32) + 0.05
    got3 = loss_sam(o3, l3, block_bytes=1024)
    jax.block_until_ready(got3)
    ref3 = loss_sam_ref(o3, l3)
    assert jnp.allclose(got3, ref3, rtol=1e-4, atol=1e-5), (got3, ref3)

    # 4) bf16 inputs (in-kernel upcast, same element-count tiling).
    k7, k8 = jax.random.split(k4)
    o4 = (jax.random.uniform(k7, (2, 4, 32, 128), dtype=jnp.float32) + 0.05
          ).astype(jnp.bfloat16)
    l4 = (jax.random.uniform(k8, (2, 4, 32, 128), dtype=jnp.float32) + 0.05
          ).astype(jnp.bfloat16)
    got4 = loss_sam(o4, l4)
    jax.block_until_ready(got4)
    ref4 = loss_sam_ref(o4, l4)
    assert jnp.allclose(got4, ref4, rtol=1e-4, atol=1e-5), (got4, ref4)

    print("KERNEL_OK")
</pallas_src>

<mosaic_0001>
module attributes {stable_mosaic.version = 11 : i64} {
  func.func @_sam_kernel(%arg0: i32, %arg1: i32, %arg2: memref<1x4x2x128xf32, #tpu.memory_space<vmem>>, %arg3: memref<1x4x2x128xf32, #tpu.memory_space<vmem>>, %arg4: memref<1x1x8x128xf32, #tpu.memory_space<vmem>>) attributes {dimension_semantics = [#tpu.dimension_semantics<parallel>, #tpu.dimension_semantics<parallel>], iteration_bounds = array<i64: 2, 1>, scalar_prefetch = 0 : i64, scratch_operands = 0 : i64, tpu.core_type = #tpu.core_type<tc>, window_params = [{transform_indices = @transform_0, window_bounds = array<i64: 1, 4, 2, 128>}, {transform_indices = @transform_1, window_bounds = array<i64: 1, 4, 2, 128>}, {transform_indices = @transform_2, window_bounds = array<i64: 1, 1, 8, 128>}]} {
    %c0 = arith.constant 0 : index
    %c0_0 = arith.constant 0 : index
    %c0_1 = arith.constant 0 : index
    %c0_2 = arith.constant 0 : index
    %0 = vector.load %arg2[%c0, %c0_0, %c0_1, %c0_2] : memref<1x4x2x128xf32, #tpu.memory_space<vmem>>, vector<1x1x2x128xf32>
    %1 = vector.shape_cast %0 : vector<1x1x2x128xf32> to vector<2x128xf32>
    %c0_3 = arith.constant 0 : index
    %c0_4 = arith.constant 0 : index
    %c0_5 = arith.constant 0 : index
    %c0_6 = arith.constant 0 : index
    %2 = vector.load %arg3[%c0_3, %c0_4, %c0_5, %c0_6] : memref<1x4x2x128xf32, #tpu.memory_space<vmem>>, vector<1x1x2x128xf32>
    %3 = vector.shape_cast %2 : vector<1x1x2x128xf32> to vector<2x128xf32>
    %4 = arith.mulf %1, %3 : vector<2x128xf32>
    %5 = arith.mulf %1, %1 : vector<2x128xf32>
    %6 = arith.mulf %3, %3 : vector<2x128xf32>
    %c0_7 = arith.constant 0 : index
    %c1 = arith.constant 1 : index
    %c0_8 = arith.constant 0 : index
    %c0_9 = arith.constant 0 : index
    %7 = vector.load %arg2[%c0_7, %c1, %c0_8, %c0_9] : memref<1x4x2x128xf32, #tpu.memory_space<vmem>>, vector<1x1x2x128xf32>
    %8 = vector.shape_cast %7 : vector<1x1x2x128xf32> to vector<2x128xf32>
    %c0_10 = arith.constant 0 : index
    %c1_11 = arith.constant 1 : index
    %c0_12 = arith.constant 0 : index
    %c0_13 = arith.constant 0 : index
    %9 = vector.load %arg3[%c0_10, %c1_11, %c0_12, %c0_13] : memref<1x4x2x128xf32, #tpu.memory_space<vmem>>, vector<1x1x2x128xf32>
    %10 = vector.shape_cast %9 : vector<1x1x2x128xf32> to vector<2x128xf32>
    %11 = arith.mulf %8, %10 : vector<2x128xf32>
    %12 = arith.addf %4, %11 : vector<2x128xf32>
    %13 = arith.mulf %8, %8 : vector<2x128xf32>
    %14 = arith.addf %5, %13 : vector<2x128xf32>
    %15 = arith.mulf %10, %10 : vector<2x128xf32>
    %16 = arith.addf %6, %15 : vector<2x128xf32>
    %c0_14 = arith.constant 0 : index
    %c2 = arith.constant 2 : index
    %c0_15 = arith.constant 0 : index
    %c0_16 = arith.constant 0 : index
    %17 = vector.load %arg2[%c0_14, %c2, %c0_15, %c0_16] : memref<1x4x2x128xf32, #tpu.memory_space<vmem>>, vector<1x1x2x128xf32>
    %18 = vector.shape_cast %17 : vector<1x1x2x128xf32> to vector<2x128xf32>
    %c0_17 = arith.constant 0 : index
    %c2_18 = arith.constant 2 : index
    %c0_19 = arith.constant 0 : index
    %c0_20 = arith.constant 0 : index
    %19 = vector.load %arg3[%c0_17, %c2_18, %c0_19, %c0_20] : memref<1x4x2x128xf32, #tpu.memory_space<vmem>>, vector<1x1x2x128xf32>
    %20 = vector.shape_cast %19 : vector<1x1x2x128xf32> to vector<2x128xf32>
    %21 = arith.mulf %18, %20 : vector<2x128xf32>
    %22 = arith.addf %12, %21 : vector<2x128xf32>
    %23 = arith.mulf %18, %18 : vector<2x128xf32>
    %24 = arith.addf %14, %23 : vector<2x128xf32>
    %25 = arith.mulf %20, %20 : vector<2x128xf32>
    %26 = arith.addf %16, %25 : vector<2x128xf32>
    %c0_21 = arith.constant 0 : index
    %c3 = arith.constant 3 : index
    %c0_22 = arith.constant 0 : index
    %c0_23 = arith.constant 0 : index
    %27 = vector.load %arg2[%c0_21, %c3, %c0_22, %c0_23] : memref<1x4x2x128xf32, #tpu.memory_space<vmem>>, vector<1x1x2x128xf32>
    %28 = vector.shape_cast %27 : vector<1x1x2x128xf32> to vector<2x128xf32>
    %c0_24 = arith.constant 0 : index
    %c3_25 = arith.constant 3 : index
    %c0_26 = arith.constant 0 : index
    %c0_27 = arith.constant 0 : index
    %29 = vector.load %arg3[%c0_24, %c3_25, %c0_26, %c0_27] : memref<1x4x2x128xf32, #tpu.memory_space<vmem>>, vector<1x1x2x128xf32>
    %30 = vector.shape_cast %29 : vector<1x1x2x128xf32> to vector<2x128xf32>
    %31 = arith.mulf %28, %30 : vector<2x128xf32>
    %32 = arith.addf %22, %31 : vector<2x128xf32>
    %33 = arith.mulf %28, %28 : vector<2x128xf32>
    %34 = arith.addf %24, %33 : vector<2x128xf32>
    %35 = arith.mulf %30, %30 : vector<2x128xf32>
    %36 = arith.addf %26, %35 : vector<2x128xf32>
    %37 = arith.mulf %34, %36 : vector<2x128xf32>
    %38 = math.rsqrt %37 : vector<2x128xf32>
    %39 = arith.mulf %32, %38 : vector<2x128xf32>
    %cst = arith.constant -1.000000e+00 : f32
    %cst_28 = arith.constant 1.000000e+00 : f32
    %40 = vector.broadcast %cst : f32 to vector<2x128xf32>
    %41 = arith.maximumf %40, %39 : vector<2x128xf32>
    %42 = vector.broadcast %cst_28 : f32 to vector<2x128xf32>
    %43 = arith.minimumf %42, %41 : vector<2x128xf32>
    %44 = math.absf %43 : vector<2x128xf32>
    %cst_29 = arith.constant -0.0012624911 : f32
    %45 = vector.broadcast %cst_29 : f32 to vector<2x128xf32>
    %46 = arith.mulf %45, %44 : vector<2x128xf32>
    %cst_30 = arith.constant 6.670090e-03 : f32
    %47 = vector.broadcast %cst_30 : f32 to vector<2x128xf32>
    %48 = arith.addf %46, %47 : vector<2x128xf32>
    %49 = arith.mulf %48, %44 : vector<2x128xf32>
    %cst_31 = arith.constant -0.0170881264 : f32
    %50 = vector.broadcast %cst_31 : f32 to vector<2x128xf32>
    %51 = arith.addf %49, %50 : vector<2x128xf32>
    %52 = arith.mulf %51, %44 : vector<2x128xf32>
    %cst_32 = arith.constant 0.0308918804 : f32
    %53 = vector.broadcast %cst_32 : f32 to vector<2x128xf32>
    %54 = arith.addf %52, %53 : vector<2x128xf32>
    %55 = arith.mulf %54, %44 : vector<2x128xf32>
    %cst_33 = arith.constant -0.0501743034 : f32
    %56 = vector.broadcast %cst_33 : f32 to vector<2x128xf32>
    %57 = arith.addf %55, %56 : vector<2x128xf32>
    %58 = arith.mulf %57, %44 : vector<2x128xf32>
    %cst_34 = arith.constant 0.0889789909 : f32
    %59 = vector.broadcast %cst_34 : f32 to vector<2x128xf32>
    %60 = arith.addf %58, %59 : vector<2x128xf32>
    %61 = arith.mulf %60, %44 : vector<2x128xf32>
    %cst_35 = arith.constant -0.214598805 : f32
    %62 = vector.broadcast %cst_35 : f32 to vector<2x128xf32>
    %63 = arith.addf %61, %62 : vector<2x128xf32>
    %64 = arith.mulf %63, %44 : vector<2x128xf32>
    %cst_36 = arith.constant 1.57079625 : f32
    %65 = vector.broadcast %cst_36 : f32 to vector<2x128xf32>
    %66 = arith.addf %64, %65 : vector<2x128xf32>
    %cst_37 = arith.constant 1.000000e+00 : f32
    %67 = vector.broadcast %cst_37 : f32 to vector<2x128xf32>
    %68 = arith.subf %67, %44 : vector<2x128xf32>
    %cst_38 = arith.constant 0.000000e+00 : f32
    %69 = vector.broadcast %cst_38 : f32 to vector<2x128xf32>
    %70 = arith.maximumf %68, %69 : vector<2x128xf32>
    %71 = math.sqrt %70 : vector<2x128xf32>
    %72 = arith.mulf %66, %71 : vector<2x128xf32>
    %cst_39 = arith.constant 0.000000e+00 : f32
    %73 = vector.broadcast %cst_39 : f32 to vector<2x128xf32>
    %74 = arith.cmpf olt, %43, %73 : vector<2x128xf32>
    %cst_40 = arith.constant 3.14159274 : f32
    %75 = vector.broadcast %cst_40 : f32 to vector<2x128xf32>
    %76 = arith.subf %75, %72 : vector<2x128xf32>
    %77 = arith.select %74, %76, %72 : vector<2x128xi1>, vector<2x128xf32>
    %78 = vector.shape_cast %77 : vector<2x128xf32> to vector<1x2x128xf32>
    %cst_41 = arith.constant dense<0.000000e+00> : vector<1xf32>
    %79 = vector.multi_reduction <add>, %78, %cst_41 [1, 2] : vector<1x2x128xf32> to vector<1xf32>
    %80 = vector.shape_cast %79 : vector<1xf32> to vector<1x1x1xf32>
    %81 = vector.extract %80[0, 0, 0] : f32 from vector<1x1x1xf32>
    %82 = vector.broadcast %81 : f32 to vector<8x128xf32>
    %c0_42 = arith.constant 0 : index
    %c0_43 = arith.constant 0 : index
    %c0_44 = arith.constant 0 : index
    %c0_45 = arith.constant 0 : index
    %83 = vector.load %arg4[%c0_42, %c0_43, %c0_44, %c0_45] : memref<1x1x8x128xf32, #tpu.memory_space<vmem>>, vector<1x1x8x128xf32>
    %84 = vector.shape_cast %83 : vector<1x1x8x128xf32> to vector<8x128xf32>
    %85 = vector.shape_cast %82 : vector<8x128xf32> to vector<1x1x8x128xf32>
    tpu.vector_store %arg4[%c0_42, %c0_43, %c0_44, %c0_45], %85 {strides = array<i32>} : memref<1x1x8x128xf32, #tpu.memory_space<vmem>>, vector<1x1x8x128xf32>,
    return
  }
  func.func @transform_0(%arg0: i32, %arg1: i32) -> (i32, i32, i32, i32) {
    %c0_i32 = arith.constant 0 : i32
    %c0_i32_0 = arith.constant 0 : i32
    %c0_i32_1 = arith.constant 0 : i32
    return %arg0, %c0_i32, %arg1, %c0_i32_0 : i32, i32, i32, i32
  }
  func.func @transform_1(%arg0: i32, %arg1: i32) -> (i32, i32, i32, i32) {
    %c0_i32 = arith.constant 0 : i32
    %c0_i32_0 = arith.constant 0 : i32
    %c0_i32_1 = arith.constant 0 : i32
    return %arg0, %c0_i32, %arg1, %c0_i32_0 : i32, i32, i32, i32
  }
  func.func @transform_2(%arg0: i32, %arg1: i32) -> (i32, i32, i32, i32) {
    %c0_i32 = arith.constant 0 : i32
    %c0_i32_0 = arith.constant 0 : i32
    %c0_i32_1 = arith.constant 0 : i32
    return %arg0, %arg1, %c0_i32, %c0_i32_0 : i32, i32, i32, i32
  }
}

</mosaic_0001>

<llo_original>
// kernel: tpu_custom_call.1
$region0: #{tpu_custom_call.1}
  #allocation0 [shape = 'u32[]', space=smem, size = 0x4, offset = 0x4, fixed_abs, tag = 'smem constant byte address 0x4 - core index']
  #allocation1 [shape = 'u32[144,128]{1,0:T(1,128)}', space=vmem, size = 0x12000, scoped, tag = 'internal scratch']
  %s0 = inlined_call_operand.hbm [shape: f32[2,4,2,128], index: 0, kind: input, shape index: {}]
  %s1 = inlined_call_operand.hbm [shape: f32[2,4,2,128], index: 1, kind: input, shape index: {}]
  %s2 = inlined_call_operand.hbm [shape: f32[2,1,8,128], index: 2, kind: output, shape index: {}]
  %s3 = sld [smem:[#allocation0]]
  $region49: #{tpu_custom_call.1} parent=0
    _
  %s5 = ssub.s32 1, %s3
  %s6 = scalar_select 0, %s5, %s3
  $region1: #{tpu_custom_call.1} parent=0
    #allocation2 [shape = 'u8[8192]{0}', space=vmem, size = 0x2000, scoped, tag = 'input window, operand 0']
    #allocation3 [shape = 's32[2]{0}', space=sflag, size = 0x8, scoped, tag = 'scoped memory for tpu_custom_call.1']
    #allocation4 [shape = 's32[2]{0}', space=sflag, size = 0x8, scoped, tag = 'scoped memory for tpu_custom_call.1']
    #allocation5 [shape = 'u8[8192]{0}', space=vmem, size = 0x2000, scoped, tag = 'input window, operand 1']
    #allocation6 [shape = 's32[2]{0}', space=sflag, size = 0x8, scoped, tag = 'scoped memory for tpu_custom_call.1']
    #allocation7 [shape = 'u8[8192]{0}', space=vmem, size = 0x2000, scoped, tag = 'output window, operand 0']
    %7 = vsyncpa [#allocation3], 0
    %s8 = scalar_lea.sflag [#allocation3], 1
    %9 = vsyncpa %s8, 0
    %10 = vsyncpa [#allocation6], 0
    %s11 = scalar_lea.sflag [#allocation6], 1
    %12 = vsyncpa %s11, 0
    %13 = vsyncpa [#allocation4], 0
    %s14 = scalar_lea.sflag [#allocation4], 1
    %15 = vsyncpa %s14, 0
    loop: start=0, step=1, limit=4
    $region2: #{tpu_custom_call.1} parent=1 // loop_pre_header
      _
    $region3: #{tpu_custom_call.1} parent=1 // loop_header
      %s17 = sphi 0, %s21
      %p18 = scmp.ge.s32.totalorder %s17, 4
      %s24 = sphi 0, %s36
      %s25 = sphi 0, %s32
      %s26 = sphi 0, %s24
      %s27 = sphi 0, %s25
      %s28 = sphi 0, %s26
      %s29 = sphi 0, %s27
      %s41 = sphi 0, %s43
      %s44 = sphi 0, %s41
      %s45 = sphi 0, %s44
      %s61 = sphi 0, %s45
      %s69 = sphi 0, %s71
      %s72 = sphi 0, %s69
      %s73 = sphi 0, %s72
      %s89 = sphi 0, %s73
      %s97 = sphi 0, %s99
      %s100 = sphi 0, %s97
      %s101 = sphi 0, %s100
      %s117 = sphi 0, %s101
    $region4: #{tpu_custom_call.1} parent=1 // loop_header_branch
      %20 = sbr.rel (%p18) target = $region8
    $region5: #{tpu_custom_call.1} parent=1 // loop_body
      %s22 = ssub.s32 %s17, 1
      %s23 = ssub.s32 %s17, 2
      %s30 = sadd.s32 1, %s25
      %p31 = scmp.ge.s32.totalorder %s30, 1
      %s32 = scalar_select %p31, 0, %s30
      %s33 = sadd.s32 1, %s24
      %s34 = scalar_select %p31, %s33, %s24
      %p35 = scmp.ge.s32.totalorder %s34, 2
      %s36 = scalar_select %p35, 0, %s34
      %s37 = ssub.s32 %s24, %s36
      %s38 = ssub.s32 %s25, %s32
      %s39 = sor.u32 %s37, %s38
      %p40 = scmp.eq.s32.totalorder %s39, 0
      %s42 = sadd.s32 %s41, 1
      %s43 = scalar_select %p40, %s41, %s42
      %p46 = pneg %p40
      %p47 = scmp.eq.s32.totalorder %s17, 1
      %p48 = por %p46, %p47
      %p49 = scmp.ne.s32.totalorder %s41, %s44
      %p50 = scmp.eq.s32.totalorder %s17, 0
      %p51 = por %p49, %p50
      %p52 = scmp.ne.s32.totalorder %s41, %s44
      %p53 = scmp.eq.s32.totalorder %s22, 1
      %p54 = por %p52, %p53
      %p55 = scmp.ne.s32.totalorder %s44, %s45
      %p56 = scmp.eq.s32.totalorder %s22, 0
      %p57 = por %p55, %p56
      %p58 = scmp.ne.s32.totalorder %s44, %s45
      %p59 = scmp.eq.s32.totalorder %s23, 1
      %p60 = por %p58, %p59
      %p62 = scmp.ne.s32.totalorder %s45, %s61
      %p63 = scmp.eq.s32.totalorder %s23, 0
      %p64 = por %p62, %p63
      %s65 = ssub.s32 %s24, %s36
      %s66 = ssub.s32 %s25, %s32
      %s67 = sor.u32 %s65, %s66
      %p68 = scmp.eq.s32.totalorder %s67, 0
      %s70 = sadd.s32 %s69, 1
      %s71 = scalar_select %p68, %s69, %s70
      %p74 = pneg %p68
      %p75 = scmp.eq.s32.totalorder %s17, 1
      %p76 = por %p74, %p75
      %p77 = scmp.ne.s32.totalorder %s69, %s72
      %p78 = scmp.eq.s32.totalorder %s17, 0
      %p79 = por %p77, %p78
      %p80 = scmp.ne.s32.totalorder %s69, %s72
      %p81 = scmp.eq.s32.totalorder %s22, 1
      %p82 = por %p80, %p81
      %p83 = scmp.ne.s32.totalorder %s72, %s73
      %p84 = scmp.eq.s32.totalorder %s22, 0
      %p85 = por %p83, %p84
      %p86 = scmp.ne.s32.totalorder %s72, %s73
      %p87 = scmp.eq.s32.totalorder %s23, 1
      %p88 = por %p86, %p87
      %p90 = scmp.ne.s32.totalorder %s73, %s89
      %p91 = scmp.eq.s32.totalorder %s23, 0
      %p92 = por %p90, %p91
      %s93 = ssub.s32 %s24, %s36
      %s94 = ssub.s32 %s25, %s32
      %s95 = sor.u32 %s93, %s94
      %p96 = scmp.eq.s32.totalorder %s95, 0
      %s98 = sadd.s32 %s97, 1
      %s99 = scalar_select %p96, %s97, %s98
      %p102 = pneg %p96
      %p103 = scmp.eq.s32.totalorder %s17, 1
      %p104 = por %p102, %p103
      %p105 = scmp.ne.s32.totalorder %s97, %s100
      %p106 = scmp.eq.s32.totalorder %s17, 0
      %p107 = por %p105, %p106
      %p108 = scmp.ne.s32.totalorder %s97, %s100
      %p109 = scmp.eq.s32.totalorder %s22, 1
      %p110 = por %p108, %p109
      %p111 = scmp.ne.s32.totalorder %s100, %s101
      %p112 = scmp.eq.s32.totalorder %s22, 0
      %p113 = por %p111, %p112
      %p114 = scmp.ne.s32.totalorder %s100, %s101
      %p115 = scmp.eq.s32.totalorder %s23, 1
      %p116 = por %p114, %p115
      %p118 = scmp.ne.s32.totalorder %s101, %s117
      %p119 = scmp.eq.s32.totalorder %s23, 0
      %p120 = por %p118, %p119
      %p121 = scmp.le.s32.totalorder 1, %s17
      %p122 = scmp.lt.s32.totalorder %s17, 3
      %p123 = pnand %p121, %p122
      %p124 = pneg %p123
      // Predicated region
      $region9: #{tpu_custom_call.1} parent=5 // pred_check
        _
      $region10: #{tpu_custom_call.1} parent=5 // pred_check_branch
        %126 = sbr.rel (%p123) target = $region12
      $region11: #{tpu_custom_call.1} parent=5 // pred_region
        %s127 = ssub.s32 %s17, 1
      $region12: #{tpu_custom_call.1} parent=5 // pred_fallthru
        _
      %p128 = scmp.lt.s32.totalorder %s17, 2
      // Predicated region
      $region13: #{tpu_custom_call.1} parent=5 // pred_check
        %p129 = pneg %p128
      $region14: #{tpu_custom_call.1} parent=5 // pred_check_branch
        %131 = sbr.rel (%p129) target = $region16
      $region15: #{tpu_custom_call.1} parent=5 // pred_region
        // Predicated region
        $region17: #{tpu_custom_call.1} parent=15 // pred_check
          %p132 = pneg %p51
        $region18: #{tpu_custom_call.1} parent=15 // pred_check_branch
          %134 = sbr.rel (%p132) target = $region20
        $region19: #{tpu_custom_call.1} parent=15 // pred_region
          %s135 = sand.u32 %s41, 1
          %s136 = scalar_lea.sflag [#allocation3], %s135
          %s137 = sand.u32 %s41, 1
          %s138 = smul.addr %s137, 8
          %s139 = scalar_lea.vmem [#allocation2], %s138
          %s141 = ssub.s32 128, 128
          %142 = vsyncadd %s136, %s141
          %s143 = smul.addr %s24, 4
          %s144 = sadd.s32 %s25, %s143
          %s145 = smul.addr %s144, 32
          %s146 = scalar_lea.hbm %s0, %s145
          %s147 = sshll.u32 %s139, 4
          %s148 = int_to_ptr.vmem [resolvable:$true] %s147
          %153 = dma.hbm_to_vmem [thread:$0]  %s146, 128, %s148, %s136, 32, 32, 2
        $region20: #{tpu_custom_call.1} parent=15 // pred_fallthru
          _
        // Predicated region
        $region21: #{tpu_custom_call.1} parent=15 // pred_check
          %p154 = pneg %p79
        $region22: #{tpu_custom_call.1} parent=15 // pred_check_branch
          %156 = sbr.rel (%p154) target = $region24
        $region23: #{tpu_custom_call.1} parent=15 // pred_region
          %s157 = sand.u32 %s69, 1
          %s158 = scalar_lea.sflag [#allocation6], %s157
          %s159 = sand.u32 %s69, 1
          %s160 = smul.addr %s159, 8
          %s161 = scalar_lea.vmem [#allocation5], %s160
          %s163 = ssub.s32 128, 128
          %164 = vsyncadd %s158, %s163
          %s165 = smul.addr %s24, 4
          %s166 = sadd.s32 %s25, %s165
          %s167 = smul.addr %s166, 32
          %s168 = scalar_lea.hbm %s1, %s167
          %s169 = sshll.u32 %s161, 4
          %s170 = int_to_ptr.vmem [resolvable:$true] %s169
          %175 = dma.hbm_to_vmem [thread:$0]  %s168, 128, %s170, %s158, 32, 32, 2
        $region24: #{tpu_custom_call.1} parent=15 // pred_fallthru
          _
      $region16: #{tpu_custom_call.1} parent=5 // pred_fallthru
        _
      %p176 = scmp.le.s32.totalorder 1, %s17
      %p177 = scmp.lt.s32.totalorder %s17, 3
      %p178 = pnand %p176, %p177
      %p179 = pneg %p178
      // Predicated region
      $region25: #{tpu_custom_call.1} parent=5 // pred_check
        _
      $region26: #{tpu_custom_call.1} parent=5 // pred_check_branch
        %181 = sbr.rel (%p178) target = $region28
      $region27: #{tpu_custom_call.1} parent=5 // pred_region
        %s182 = ssub.s32 %s17, 1
        %s183 = sand.u32 %s44, 1
        %s184 = scalar_lea.sflag [#allocation3], %s183
        %s185 = sand.u32 %s44, 1
        %s186 = smul.addr %s185, 8
        %s187 = scalar_lea.vmem [#allocation2], %s186
        // Predicated region
        $region29: #{tpu_custom_call.1} parent=27 // pred_check
          %p188 = pneg %p57
        $region30: #{tpu_custom_call.1} parent=27 // pred_check_branch
          %190 = sbr.rel (%p188) target = $region32
        $region31: #{tpu_custom_call.1} parent=27 // pred_region
          %191 = dma.done %s184, 128
        $region32: #{tpu_custom_call.1} parent=27 // pred_fallthru
          _
        %s192 = sand.u32 %s72, 1
        %s193 = scalar_lea.sflag [#allocation6], %s192
        %s194 = sand.u32 %s72, 1
        %s195 = smul.addr %s194, 8
        %s196 = scalar_lea.vmem [#allocation5], %s195
        // Predicated region
        $region33: #{tpu_custom_call.1} parent=27 // pred_check
          %p197 = pneg %p85
        $region34: #{tpu_custom_call.1} parent=27 // pred_check_branch
          %199 = sbr.rel (%p197) target = $region36
        $region35: #{tpu_custom_call.1} parent=27 // pred_region
          %200 = dma.done %s193, 128
        $region36: #{tpu_custom_call.1} parent=27 // pred_fallthru
          _
        %s201 = sand.u32 %s44, 1
        %s202 = scalar_lea.sflag [#allocation3], %s201
        %s203 = sand.u32 %s44, 1
        %s204 = smul.addr %s203, 8
        %s205 = scalar_lea.vmem [#allocation2], %s204
        %p206 = pneg %p57
        %p207 = pneg %p54
        %s208 = sand.u32 %s72, 1
        %s209 = scalar_lea.sflag [#allocation6], %s208
        %s210 = sand.u32 %s72, 1
        %s211 = smul.addr %s210, 8
        %s212 = scalar_lea.vmem [#allocation5], %s211
        %p213 = pneg %p85
        %p214 = pneg %p82
        %p215 = pneg %p113
        %p216 = pneg %p110
        %s217 = sand.u32 %s100, 1
        %s218 = scalar_lea.sflag [#allocation4], %s217
        %s219 = sand.u32 %s100, 1
        %s220 = smul.addr %s219, 8
        %s221 = scalar_lea.vmem [#allocation7], %s220
        %v222 = vld [vmem:[%s187] sm:$0x3]
        %v223 = vld [vmem:[%s196] sm:$0x3]
        %v224 = vmul.f32 %v222, %v223
        %v225 = vmul.f32 %v222, %v222
        %v226 = vmul.f32 %v223, %v223
        %s227 = scalar_lea.vmem %s187, 2 [#allocation2]
        %v228 = vld [vmem:[%s227] sm:$0x3]
        %s229 = scalar_lea.vmem %s196, 2 [#allocation5]
        %v230 = vld [vmem:[%s229] sm:$0x3]
        %v231 = vmul.f32 %v228, %v230
        %v232 = vadd.f32 %v224, %v231
        %v233 = vmul.f32 %v228, %v228
        %v234 = vadd.f32 %v225, %v233
        %v235 = vmul.f32 %v230, %v230
        %v236 = vadd.f32 %v226, %v235
        %s237 = scalar_lea.vmem %s187, 4 [#allocation2]
        %v238 = vld [vmem:[%s237] sm:$0x3]
        %s239 = scalar_lea.vmem %s196, 4 [#allocation5]
        %v240 = vld [vmem:[%s239] sm:$0x3]
        %v241 = vmul.f32 %v238, %v240
        %v242 = vadd.f32 %v232, %v241
        %v243 = vmul.f32 %v238, %v238
        %v244 = vadd.f32 %v234, %v243
        %v245 = vmul.f32 %v240, %v240
        %v246 = vadd.f32 %v236, %v245
        %s247 = scalar_lea.vmem %s187, 6 [#allocation2]
        %v248 = vld [vmem:[%s247] sm:$0x3]
        %s249 = scalar_lea.vmem %s196, 6 [#allocation5]
        %v250 = vld [vmem:[%s249] sm:$0x3]
        %v251 = vmul.f32 %v248, %v250
        %v252 = vadd.f32 %v242, %v251
        %v253 = vmul.f32 %v248, %v248
        %v254 = vadd.f32 %v244, %v253
        %v255 = vmul.f32 %v250, %v250
        %v256 = vadd.f32 %v246, %v255
        %v257 = vmul.f32 %v254, %v256
        %v258 = vrsqrt.pop %v257
        %v259 = vmul.f32 %v252, %v258
        %v260 = vmax.f32 %v259, -1.0
        %v261 = vmin.f32 %v260, 1.0
        %v262 = vand.u32 2147483647, %v261
        %v263 = vmul.f32 %v262, -0.0012624911
        %v264 = vadd.f32 %v263, 0.00667009
        %v265 = vmul.f32 %v264, %v262
        %v266 = vadd.f32 %v265, -0.017088126
        %v267 = vmul.f32 %v266, %v262
        %v268 = vadd.f32 %v267, 0.03089188
        %v269 = vmul.f32 %v268, %v262
        %v270 = vadd.f32 %v269, -0.050174303
        %v271 = vmul.f32 %v270, %v262
        %v272 = vadd.f32 %v271, 0.08897899
        %v273 = vmul.f32 %v272, %v262
        %v274 = vadd.f32 %v273, -0.2145988
        %v275 = vmul.f32 %v274, %v262
        %v276 = vadd.f32 %v275, 1.5707963
        %v277 = vsub.f32 1.0, %v262
        %v278 = vmax.f32 %v277, 0.0
        %v279 = vrsqrt.pop %v278
        %v280 = vmul.f32 %v278, %v279
        %vm281 = vcmp.eq.f32.partialorder %v278, inf
        %v282 = vsel %vm281, %v278, %v280
        %vm283 = vcmp.eq.f32.partialorder %v278, 0.0
        %v284 = vand.u32 %v278, 2147483648
        %v285 = vsel %vm283, %v284, %v282
        %v286 = vmul.f32 %v276, %v285
        %vm287 = vcmp.lt.f32.partialorder %v261, 0.0
        %v288 = vsub.f32 3.1415927, %v286
        %v289 = vsel %vm287, %v288, %v286
        %vm290 = vcmask 1041408
        %v291 = vsel %vm290, %v289, 0.0
        %292 = vadd.xlane.f32.xlu0 %v291
        %v293 = vpop.xlane.xlu0 %292
        %v294 = vrot.slane %v293, 4
        %v295 = vadd.f32 %v293, %v294
        %v296 = vrot.slane %v295, 2
        %v297 = vadd.f32 %v295, %v296
        %v298 = vrot.slane %v297, 1
        %v299 = vadd.f32 %v297, %v298
        %s300 = vtos %v299
        %v301 = vstv %s300
        %302 = vst [vmem:[%s221] sm:$0xff] %v301
        %s303 = sand.u32 %s100, 1
        %s304 = scalar_lea.sflag [#allocation4], %s303
        %s305 = sand.u32 %s100, 1
        %s306 = smul.addr %s305, 8
        %s307 = scalar_lea.vmem [#allocation7], %s306
        // Predicated region
        $region37: #{tpu_custom_call.1} parent=27 // pred_check
          %p308 = pneg %p110
        $region38: #{tpu_custom_call.1} parent=27 // pred_check_branch
          %310 = sbr.rel (%p308) target = $region40
        $region39: #{tpu_custom_call.1} parent=27 // pred_region
          %s312 = ssub.s32 128, 128
          %313 = vsyncadd %s304, %s312
          %s314 = sadd.s32 %s27, %s26
          %s315 = smul.addr %s314, 128
          %s316 = scalar_lea.hbm %s2, %s315
          %s318 = sshll.u32 %s307, 4
          %s319 = int_to_ptr.vmem [resolvable:$true] %s318
          %321 = dma.vmem_to_hbm [thread:$0]  %s319, 128, %s316, %s304
        $region40: #{tpu_custom_call.1} parent=27 // pred_fallthru
          _
      $region28: #{tpu_custom_call.1} parent=5 // pred_fallthru
        _
      %p322 = scmp.le.s32.totalorder 2, %s17
      // Predicated region
      $region41: #{tpu_custom_call.1} parent=5 // pred_check
        %p323 = pneg %p322
      $region42: #{tpu_custom_call.1} parent=5 // pred_check_branch
        %325 = sbr.rel (%p323) target = $region44
      $region43: #{tpu_custom_call.1} parent=5 // pred_region
        %s326 = ssub.s32 %s17, 2
        // Predicated region
        $region45: #{tpu_custom_call.1} parent=43 // pred_check
          %p327 = pneg %p116
        $region46: #{tpu_custom_call.1} parent=43 // pred_check_branch
          %329 = sbr.rel (%p327) target = $region48
        $region47: #{tpu_custom_call.1} parent=43 // pred_region
          %s330 = sand.u32 %s101, 1
          %s331 = scalar_lea.sflag [#allocation4], %s330
          %s332 = sand.u32 %s101, 1
          %s333 = smul.addr %s332, 8
          %s334 = scalar_lea.vmem [#allocation7], %s333
          %335 = dma.done %s331, 128
        $region48: #{tpu_custom_call.1} parent=43 // pred_fallthru
          _
      $region44: #{tpu_custom_call.1} parent=5 // pred_fallthru
        _
    $region6: #{tpu_custom_call.1} parent=1 // loop_footer
      %s21 = sadd.s32 1, %s17
    $region7: #{tpu_custom_call.1} parent=1 // loop_footer_branch
      %16 = sbr.rel target = $region3
    $region8: #{tpu_custom_call.1} parent=1 // loop_exit
      _
    %336 = vsyncpa [#allocation3], 1
    %s337 = scalar_lea.sflag [#allocation3], 1
    %338 = vsyncpa %s337, 1
    %339 = vsyncpa [#allocation6], 1
    %s340 = scalar_lea.sflag [#allocation6], 1
    %341 = vsyncpa %s340, 1
    %342 = vsyncpa [#allocation4], 1
    %s343 = scalar_lea.sflag [#allocation4], 1
    %344 = vsyncpa %s343, 1

</llo_original>
